<compile_context>
chip_gen: v7x
topology: tpu7x:2x2x1
jax: 0.10.0
libtpu: 0.0.40
codegen_flags: <defaults>
</compile_context>

<pallas_src>
import numpy as np
import jax
import jax.numpy as jnp
from jax.experimental import pallas as pl
from jax.experimental.pallas import tpu as pltpu

GAUSS_MIXTURE_COMPS = 5
SAC_LOG_STD_CLAMPS = (-5.0, 2.0)
SAC_MEAN_CLAMPS = (-9.0, 9.0)
STANDARDIZED_OB_CLAMPS = (-5.0, 5.0)
LN_EPS = 1e-5
_NO_CLAMP = 1e30  # "no clamp" sentinel for lo/hi rows (finite, avoids inf edge cases)


def _cdiv(a, b):
    return -(-a // b)


def _round_up(x, m):
    return ((x + m - 1) // m) * m


def _choose_tiles(B, tile_b, min_rows_for_split=512):
    """Pick tile count first, then TB, to bound padding and (on v7x) keep >=2 tiles."""
    num_tiles = _cdiv(B, tile_b)
    # v7x megacore: if everything fits in one tile but the batch is large enough
    # to be worth splitting, use two tiles so both TensorCores get work.
    if num_tiles < 2 and B >= min_rows_for_split:
        num_tiles = 2
    TB = _round_up(_cdiv(B, num_tiles), 8)
    B_pad = num_tiles * TB
    return TB, B_pad, num_tiles


def _kernel(ob_ref, inv_sd_ref, shift_ref,
            w1_ref, b1_ref, g1_ref, be1_ref,
            w2_ref, b2_ref, g2_ref, be2_ref,
            wh_ref, bh_ref, lo_ref, hi_ref, std_mask_ref,
            out_ref):
    # ---- observation standardization + clamp ------------------------------
    # (ob - mu) / sd  ==  ob * (1/sd) - mu*(1/sd)   (reciprocal hoisted to host)
    x = ob_ref[...] * inv_sd_ref[...] - shift_ref[...]
    x = jnp.clip(x, STANDARDIZED_OB_CLAMPS[0], STANDARDIZED_OB_CLAMPS[1])

    def fc_ln_relu(x, w_ref, b_ref, g_ref, be_ref):
        # bf16 operands, f32 accumulation (MXU-native on v5e/v6e/v7x)
        h = jnp.dot(x.astype(jnp.bfloat16), w_ref[...],
                    preferred_element_type=jnp.float32) + b_ref[...]
        # single-pass LN statistics: var = E[h^2] - mu^2 (safe in f32 here)
        mu = jnp.mean(h, axis=-1, keepdims=True)
        var = jnp.maximum(jnp.mean(h * h, axis=-1, keepdims=True) - mu * mu, 0.0)
        r = jax.lax.rsqrt(var + LN_EPS)                  # (TB, 1)
        h = (h - mu) * (r * g_ref[...]) + be_ref[...]    # gain folded into scale
        return jnp.maximum(h, 0.0)

    # ---- fc_block_1 / fc_block_2: Linear -> LayerNorm -> ReLU --------------
    h = fc_ln_relu(x, w1_ref, b1_ref, g1_ref, be1_ref)
    h = fc_ln_relu(h, w2_ref, b2_ref, g2_ref, be2_ref)

    # ---- head Linear (grouped + lane-dense: zero-padded to 128 columns) ----
    packed = jnp.dot(h.astype(jnp.bfloat16), wh_ref[...],
                     preferred_element_type=jnp.float32) + bh_ref[...]

    # fused per-column postprocessing:
    #   clipped = clip(packed, lo_col, hi_col)    (mean cols: [-9,9], log_std: [-5,2],
    #                                              log_mix / pad: no-op bounds)
    #   out     = exp(clipped) on std columns, clipped elsewhere
    clipped = jnp.clip(packed, lo_ref[...], hi_ref[...])
    out_ref[...] = jnp.where(std_mask_ref[...] > 0.5, jnp.exp(clipped), clipped)


def mixture_tanh_gauss_actor_forward(ob, params, ac_dim, tile_b=2048):
    """Runs the Pallas kernel and unpacks (log_mixture, mean, std)."""
    B, ob_dim = ob.shape
    comps = GAUSS_MIXTURE_COMPS
    comp_width = 2 * ac_dim + 1           # [log_mixture | mean(ac_dim) | log_std(ac_dim)]
    out_cols = comps * comp_width
    out_cols_padded = _round_up(out_cols, 128)

    h0 = params["w1"].shape[1]
    h1 = params["w2"].shape[1]

    # batch tiling: rows are independent; bounded padding, >=2 tiles when worth it
    TB, B_pad, num_tiles = _choose_tiles(B, tile_b)
    ob_p = ob if B_pad == B else jnp.pad(ob, ((0, B_pad - B), (0, 0)))

    # one-time param transforms (host/XLA side, outside the kernel)
    inv_sd = 1.0 / params["rms_sd"]
    shift = params["rms_mu"] * inv_sd

    # head column permutation -> grouped layout [log_mix | means | log_stds | pad]
    perm = np.empty(out_cols, np.int32)
    perm[:comps] = np.arange(comps) * comp_width
    perm[comps:comps + comps * ac_dim] = (
        np.arange(comps)[:, None] * comp_width + 1 + np.arange(ac_dim)[None, :]
    ).reshape(-1)
    perm[comps + comps * ac_dim:] = (
        np.arange(comps)[:, None] * comp_width + 1 + ac_dim + np.arange(ac_dim)[None, :]
    ).reshape(-1)
    perm = jnp.asarray(perm)

    pad_cols = out_cols_padded - out_cols
    wh_g = jnp.pad(params["wh"][:, perm], ((0, 0), (0, pad_cols)))
    bh_g = jnp.pad(params["bh"][:, perm], ((0, 0), (0, pad_cols)))

    # bf16 weights (f32 accumulation inside the kernel)
    w1_b = params["w1"].astype(jnp.bfloat16)
    w2_b = params["w2"].astype(jnp.bfloat16)
    wh_b = wh_g.astype(jnp.bfloat16)

    # compile-time per-column clamp rows + std mask for the grouped layout
    mean_lo, mean_hi = out_cols_padded * [0], None  # placeholders (overwritten below)
    lo_np = np.full(out_cols_padded, -_NO_CLAMP, np.float32)
    hi_np = np.full(out_cols_padded, _NO_CLAMP, np.float32)
    mean_start = comps
    std_start = comps + comps * ac_dim
    std_end = std_start + comps * ac_dim
    lo_np[mean_start:std_start] = SAC_MEAN_CLAMPS[0]
    hi_np[mean_start:std_start] = SAC_MEAN_CLAMPS[1]
    lo_np[std_start:std_end] = SAC_LOG_STD_CLAMPS[0]
    hi_np[std_start:std_end] = SAC_LOG_STD_CLAMPS[1]
    std_mask_np = np.zeros(out_cols_padded, np.float32)
    std_mask_np[std_start:std_end] = 1.0
    lo_row = jnp.asarray(lo_np[None, :])
    hi_row = jnp.asarray(hi_np[None, :])
    std_mask = jnp.asarray(std_mask_np[None, :])

    args = (
        ob_p, inv_sd, shift,
        w1_b, params["b1"], params["g1"], params["be1"],
        w2_b, params["b2"], params["g2"], params["be2"],
        wh_b, bh_g, lo_row, hi_row, std_mask,
    )

    def row_spec(cols):        # batch-tiled, pipelined
        return pl.BlockSpec((TB, cols), lambda i: (i, 0))

    def const_spec(a):         # whole array, resident across grid steps
        return pl.BlockSpec(a.shape, lambda i: (0, 0))

    in_specs = [row_spec(ob_dim)] + [const_spec(a) for a in args[1:]]
    out_specs = pl.BlockSpec((TB, out_cols_padded), lambda i: (i, 0))

    param_bytes = (4 * (2 * ob_dim + 3 * h0 + 3 * h1 + 3 * out_cols_padded)
                   + 2 * (ob_dim * h0 + h0 * h1 + h1 * out_cols_padded))
    cost = pl.CostEstimate(
        flops=2 * B_pad * (ob_dim * h0 + h0 * h1 + h1 * out_cols_padded),
        transcendentals=B_pad * (2 + out_cols_padded),
        bytes_accessed=4 * B_pad * (ob_dim + out_cols_padded) + param_bytes,
    )

    packed = pl.pallas_call(
        _kernel,
        out_shape=jax.ShapeDtypeStruct((B_pad, out_cols_padded), jnp.float32),
        grid=(num_tiles,),
        in_specs=in_specs,
        out_specs=out_specs,
        compiler_params=pltpu.CompilerParams(
            dimension_semantics=("parallel",)),
        cost_estimate=cost,
    )(*args)

    # glue: contiguous slices + reshape only (grouped layout -> free views)
    ac_log_mixture_weights = packed[:B, :comps]
    ac_mean = packed[:B, mean_start:std_start].reshape(B, comps, ac_dim)
    ac_std = packed[:B, std_start:std_end].reshape(B, comps, ac_dim)
    return ac_log_mixture_weights, ac_mean, ac_std


def _reference_forward(ob, params, ac_dim):
    """Pure-JAX f32 reference matching the PyTorch forward semantics."""
    x = (ob - params["rms_mu"]) / params["rms_sd"]
    x = jnp.clip(x, *STANDARDIZED_OB_CLAMPS)

    def block(x, w, b, g, be):
        h = x @ w + b
        mu = h.mean(-1, keepdims=True)
        var = ((h - mu) ** 2).mean(-1, keepdims=True)
        h = (h - mu) / jnp.sqrt(var + LN_EPS) * g + be
        return jnp.maximum(h, 0.0)

    h = block(x, params["w1"], params["b1"], params["g1"], params["be1"])
    h = block(h, params["w2"], params["b2"], params["g2"], params["be2"])
    packed = (h @ params["wh"] + params["bh"]).reshape(
        -1, GAUSS_MIXTURE_COMPS, 2 * ac_dim + 1)
    log_mix = packed[..., 0]
    mean = jnp.clip(packed[..., 1:1 + ac_dim], *SAC_MEAN_CLAMPS)
    std = jnp.exp(jnp.clip(packed[..., 1 + ac_dim:], *SAC_LOG_STD_CLAMPS))
    return log_mix, mean, std


def make_params(key, ob_dim, hidden_dims, ac_dim):
    """Deterministic parameter init mimicking the module's __init__ shapes
    (orthogonal init with gain 5/3 for the trunk, 0.01 for the head)."""
    k = jax.random.split(key, 8)
    ortho_trunk = jax.nn.initializers.orthogonal(scale=5.0 / 3.0)
    ortho_head = jax.nn.initializers.orthogonal(scale=0.01)
    h0, h1 = hidden_dims
    out_cols = GAUSS_MIXTURE_COMPS * (2 * ac_dim + 1)  # state_dependent_std=True
    params = {
        # synthetic running-mean/std for rms_obs.standardize
        "rms_mu": jax.random.normal(k[0], (1, ob_dim), jnp.float32) * 0.1,
        "rms_sd": jnp.abs(jax.random.normal(k[1], (1, ob_dim), jnp.float32)) + 0.5,
        # fc_block_1
        "w1": ortho_trunk(k[2], (ob_dim, h0), jnp.float32),
        "b1": jnp.zeros((1, h0), jnp.float32),
        "g1": jnp.ones((1, h0), jnp.float32),
        "be1": jnp.zeros((1, h0), jnp.float32),
        # fc_block_2
        "w2": ortho_trunk(k[3], (h0, h1), jnp.float32),
        "b2": jnp.zeros((1, h1), jnp.float32),
        "g2": jnp.ones((1, h1), jnp.float32),
        "be2": jnp.zeros((1, h1), jnp.float32),
        # head
        "wh": ortho_head(k[4], (h1, out_cols), jnp.float32),
        "bh": jnp.zeros((1, out_cols), jnp.float32),
    }
    return params


def _check(got, ref, atol=2e-2, rtol=2e-2):
    # bf16 matmul operands (f32 accumulation) -> looser tolerance than pure f32
    for a, b in zip(got, ref):
        assert a.shape == b.shape, (a.shape, b.shape)
        assert jnp.allclose(a, b, atol=atol, rtol=rtol), float(jnp.abs(a - b).max())


if __name__ == "__main__":
    B, OB_DIM, AC_DIM = 8, 16, 6
    HIDDEN = (32, 32)

    key = jax.random.PRNGKey(0)
    kp, kx, kx2, kx3 = jax.random.split(key, 4)
    params = make_params(kp, OB_DIM, HIDDEN, AC_DIM)
    ob = jax.random.normal(kx, (B, OB_DIM), jnp.float32)

    out = mixture_tanh_gauss_actor_forward(ob, params, AC_DIM)
    jax.block_until_ready(out)
    log_mix, ac_mean, ac_std = out
    assert log_mix.shape == (B, GAUSS_MIXTURE_COMPS)
    assert ac_mean.shape == (B, GAUSS_MIXTURE_COMPS, AC_DIM)
    assert ac_std.shape == (B, GAUSS_MIXTURE_COMPS, AC_DIM)
    _check(out, _reference_forward(ob, params, AC_DIM))

    # batch not a multiple of 8 (exercises row padding in a single tile)
    B2 = 12
    ob2 = jax.random.normal(kx2, (B2, OB_DIM), jnp.float32)
    out2 = mixture_tanh_gauss_actor_forward(ob2, params, AC_DIM)
    jax.block_until_ready(out2)
    _check(out2, _reference_forward(ob2, params, AC_DIM))

    # multi-tile grid with bounded padding (new tile-selection path):
    # B=200, tile_b=128 -> 2 tiles of TB=104 rows, B_pad=208 (only 8 padded rows)
    B3 = 200
    ob3 = jax.random.normal(kx3, (B3, OB_DIM), jnp.float32)
    out3 = mixture_tanh_gauss_actor_forward(ob3, params, AC_DIM, tile_b=128)
    jax.block_until_ready(out3)
    _check(out3, _reference_forward(ob3, params, AC_DIM))

    print("KERNEL_OK")
</pallas_src>

<mosaic_0001>
module attributes {stable_mosaic.version = 11 : i64} {
  func.func @_kernel(%arg0: i32, %arg1: memref<8x16xf32, #tpu.memory_space<vmem>>, %arg2: memref<1x16xf32, #tpu.memory_space<vmem>>, %arg3: memref<1x16xf32, #tpu.memory_space<vmem>>, %arg4: memref<16x32xbf16, #tpu.memory_space<vmem>>, %arg5: memref<1x32xf32, #tpu.memory_space<vmem>>, %arg6: memref<1x32xf32, #tpu.memory_space<vmem>>, %arg7: memref<1x32xf32, #tpu.memory_space<vmem>>, %arg8: memref<32x32xbf16, #tpu.memory_space<vmem>>, %arg9: memref<1x32xf32, #tpu.memory_space<vmem>>, %arg10: memref<1x32xf32, #tpu.memory_space<vmem>>, %arg11: memref<1x32xf32, #tpu.memory_space<vmem>>, %arg12: memref<32x128xbf16, #tpu.memory_space<vmem>>, %arg13: memref<1x128xf32, #tpu.memory_space<vmem>>, %arg14: memref<1x128xf32, #tpu.memory_space<vmem>>, %arg15: memref<1x128xf32, #tpu.memory_space<vmem>>, %arg16: memref<1x128xf32, #tpu.memory_space<vmem>>, %arg17: memref<8x128xf32, #tpu.memory_space<vmem>>) attributes {dimension_semantics = [#tpu.dimension_semantics<parallel>], iteration_bounds = array<i64: 1>, scalar_prefetch = 0 : i64, scratch_operands = 0 : i64, tpu.core_type = #tpu.core_type<tc>, window_params = [{transform_indices = @transform_0, window_bounds = array<i64: 8, 16>}, {pipeline_mode = #tpu.pipeline_mode<synchronous>, transform_indices = @transform_1, window_bounds = array<i64: 1, 16>}, {pipeline_mode = #tpu.pipeline_mode<synchronous>, transform_indices = @transform_2, window_bounds = array<i64: 1, 16>}, {pipeline_mode = #tpu.pipeline_mode<synchronous>, transform_indices = @transform_3, window_bounds = array<i64: 16, 32>}, {pipeline_mode = #tpu.pipeline_mode<synchronous>, transform_indices = @transform_4, window_bounds = array<i64: 1, 32>}, {pipeline_mode = #tpu.pipeline_mode<synchronous>, transform_indices = @transform_5, window_bounds = array<i64: 1, 32>}, {pipeline_mode = #tpu.pipeline_mode<synchronous>, transform_indices = @transform_6, window_bounds = array<i64: 1, 32>}, {pipeline_mode = #tpu.pipeline_mode<synchronous>, transform_indices = @transform_7, window_bounds = array<i64: 32, 32>}, {pipeline_mode = #tpu.pipeline_mode<synchronous>, transform_indices = @transform_8, window_bounds = array<i64: 1, 32>}, {pipeline_mode = #tpu.pipeline_mode<synchronous>, transform_indices = @transform_9, window_bounds = array<i64: 1, 32>}, {pipeline_mode = #tpu.pipeline_mode<synchronous>, transform_indices = @transform_10, window_bounds = array<i64: 1, 32>}, {pipeline_mode = #tpu.pipeline_mode<synchronous>, transform_indices = @transform_11, window_bounds = array<i64: 32, 128>}, {pipeline_mode = #tpu.pipeline_mode<synchronous>, transform_indices = @transform_12, window_bounds = array<i64: 1, 128>}, {pipeline_mode = #tpu.pipeline_mode<synchronous>, transform_indices = @transform_13, window_bounds = array<i64: 1, 128>}, {pipeline_mode = #tpu.pipeline_mode<synchronous>, transform_indices = @transform_14, window_bounds = array<i64: 1, 128>}, {pipeline_mode = #tpu.pipeline_mode<synchronous>, transform_indices = @transform_15, window_bounds = array<i64: 1, 128>}, {transform_indices = @transform_16, window_bounds = array<i64: 8, 128>}]} {
    %c0 = arith.constant 0 : index
    %c0_0 = arith.constant 0 : index
    %0 = vector.load %arg1[%c0, %c0_0] : memref<8x16xf32, #tpu.memory_space<vmem>>, vector<8x16xf32>
    %c0_1 = arith.constant 0 : index
    %c0_2 = arith.constant 0 : index
    %1 = vector.load %arg2[%c0_1, %c0_2] : memref<1x16xf32, #tpu.memory_space<vmem>>, vector<1x16xf32>
    %2 = vector.broadcast %1 : vector<1x16xf32> to vector<8x16xf32>
    %3 = arith.mulf %0, %2 : vector<8x16xf32>
    %c0_3 = arith.constant 0 : index
    %c0_4 = arith.constant 0 : index
    %4 = vector.load %arg3[%c0_3, %c0_4] : memref<1x16xf32, #tpu.memory_space<vmem>>, vector<1x16xf32>
    %5 = vector.broadcast %4 : vector<1x16xf32> to vector<8x16xf32>
    %6 = arith.subf %3, %5 : vector<8x16xf32>
    %cst = arith.constant -5.000000e+00 : f32
    %cst_5 = arith.constant 5.000000e+00 : f32
    %7 = vector.broadcast %cst : f32 to vector<8x16xf32>
    %8 = arith.maximumf %7, %6 : vector<8x16xf32>
    %9 = vector.broadcast %cst_5 : f32 to vector<8x16xf32>
    %10 = arith.minimumf %9, %8 : vector<8x16xf32>
    %11 = arith.truncf %10 : vector<8x16xf32> to vector<8x16xbf16>
    %c0_6 = arith.constant 0 : index
    %c0_7 = arith.constant 0 : index
    %12 = vector.load %arg4[%c0_6, %c0_7] : memref<16x32xbf16, #tpu.memory_space<vmem>>, vector<16x32xbf16>
    %cst_8 = arith.constant dense<0.000000e+00> : vector<8x32xf32>
    %13 = tpu.matmul %11, %12, %cst_8 {dimension_numbers = #tpu.dot_dimension_numbers<[1], [0], [0], [1], [0, 0, 1, 1], [], []>} : vector<8x16xbf16>, vector<16x32xbf16>, vector<8x32xf32> -> vector<8x32xf32>
    %c0_9 = arith.constant 0 : index
    %c0_10 = arith.constant 0 : index
    %14 = vector.load %arg5[%c0_9, %c0_10] : memref<1x32xf32, #tpu.memory_space<vmem>>, vector<1x32xf32>
    %15 = vector.broadcast %14 : vector<1x32xf32> to vector<8x32xf32>
    %16 = arith.addf %13, %15 : vector<8x32xf32>
    %cst_11 = arith.constant dense<0.000000e+00> : vector<8xf32>
    %17 = vector.multi_reduction <add>, %16, %cst_11 [1] : vector<8x32xf32> to vector<8xf32>
    %18 = vector.shape_cast %17 : vector<8xf32> to vector<8x1xf32>
    %cst_12 = arith.constant 3.200000e+01 : f32
    %19 = vector.broadcast %cst_12 : f32 to vector<8x1xf32>
    %20 = arith.divf %18, %19 : vector<8x1xf32>
    %21 = arith.mulf %16, %16 : vector<8x32xf32>
    %cst_13 = arith.constant dense<0.000000e+00> : vector<8xf32>
    %22 = vector.multi_reduction <add>, %21, %cst_13 [1] : vector<8x32xf32> to vector<8xf32>
    %23 = vector.shape_cast %22 : vector<8xf32> to vector<8x1xf32>
    %cst_14 = arith.constant 3.200000e+01 : f32
    %24 = vector.broadcast %cst_14 : f32 to vector<8x1xf32>
    %25 = arith.divf %23, %24 : vector<8x1xf32>
    %26 = arith.mulf %20, %20 : vector<8x1xf32>
    %27 = arith.subf %25, %26 : vector<8x1xf32>
    %cst_15 = arith.constant 0.000000e+00 : f32
    %28 = vector.broadcast %cst_15 : f32 to vector<8x1xf32>
    %29 = arith.maximumf %27, %28 : vector<8x1xf32>
    %cst_16 = arith.constant 9.99999974E-6 : f32
    %30 = vector.broadcast %cst_16 : f32 to vector<8x1xf32>
    %31 = arith.addf %29, %30 : vector<8x1xf32>
    %32 = math.rsqrt %31 : vector<8x1xf32>
    %33 = vector.broadcast %20 : vector<8x1xf32> to vector<8x32xf32>
    %34 = arith.subf %16, %33 : vector<8x32xf32>
    %c0_17 = arith.constant 0 : index
    %c0_18 = arith.constant 0 : index
    %35 = vector.load %arg6[%c0_17, %c0_18] : memref<1x32xf32, #tpu.memory_space<vmem>>, vector<1x32xf32>
    %36 = vector.broadcast %32 : vector<8x1xf32> to vector<8x32xf32>
    %37 = vector.broadcast %35 : vector<1x32xf32> to vector<8x32xf32>
    %38 = arith.mulf %36, %37 : vector<8x32xf32>
    %39 = arith.mulf %34, %38 : vector<8x32xf32>
    %c0_19 = arith.constant 0 : index
    %c0_20 = arith.constant 0 : index
    %40 = vector.load %arg7[%c0_19, %c0_20] : memref<1x32xf32, #tpu.memory_space<vmem>>, vector<1x32xf32>
    %41 = vector.broadcast %40 : vector<1x32xf32> to vector<8x32xf32>
    %42 = arith.addf %39, %41 : vector<8x32xf32>
    %cst_21 = arith.constant 0.000000e+00 : f32
    %43 = vector.broadcast %cst_21 : f32 to vector<8x32xf32>
    %44 = arith.maximumf %42, %43 : vector<8x32xf32>
    %45 = arith.truncf %44 : vector<8x32xf32> to vector<8x32xbf16>
    %c0_22 = arith.constant 0 : index
    %c0_23 = arith.constant 0 : index
    %46 = vector.load %arg8[%c0_22, %c0_23] : memref<32x32xbf16, #tpu.memory_space<vmem>>, vector<32x32xbf16>
    %cst_24 = arith.constant dense<0.000000e+00> : vector<8x32xf32>
    %47 = tpu.matmul %45, %46, %cst_24 {dimension_numbers = #tpu.dot_dimension_numbers<[1], [0], [0], [1], [0, 0, 1, 1], [], []>} : vector<8x32xbf16>, vector<32x32xbf16>, vector<8x32xf32> -> vector<8x32xf32>
    %c0_25 = arith.constant 0 : index
    %c0_26 = arith.constant 0 : index
    %48 = vector.load %arg9[%c0_25, %c0_26] : memref<1x32xf32, #tpu.memory_space<vmem>>, vector<1x32xf32>
    %49 = vector.broadcast %48 : vector<1x32xf32> to vector<8x32xf32>
    %50 = arith.addf %47, %49 : vector<8x32xf32>
    %cst_27 = arith.constant dense<0.000000e+00> : vector<8xf32>
    %51 = vector.multi_reduction <add>, %50, %cst_27 [1] : vector<8x32xf32> to vector<8xf32>
    %52 = vector.shape_cast %51 : vector<8xf32> to vector<8x1xf32>
    %cst_28 = arith.constant 3.200000e+01 : f32
    %53 = vector.broadcast %cst_28 : f32 to vector<8x1xf32>
    %54 = arith.divf %52, %53 : vector<8x1xf32>
    %55 = arith.mulf %50, %50 : vector<8x32xf32>
    %cst_29 = arith.constant dense<0.000000e+00> : vector<8xf32>
    %56 = vector.multi_reduction <add>, %55, %cst_29 [1] : vector<8x32xf32> to vector<8xf32>
    %57 = vector.shape_cast %56 : vector<8xf32> to vector<8x1xf32>
    %cst_30 = arith.constant 3.200000e+01 : f32
    %58 = vector.broadcast %cst_30 : f32 to vector<8x1xf32>
    %59 = arith.divf %57, %58 : vector<8x1xf32>
    %60 = arith.mulf %54, %54 : vector<8x1xf32>
    %61 = arith.subf %59, %60 : vector<8x1xf32>
    %cst_31 = arith.constant 0.000000e+00 : f32
    %62 = vector.broadcast %cst_31 : f32 to vector<8x1xf32>
    %63 = arith.maximumf %61, %62 : vector<8x1xf32>
    %cst_32 = arith.constant 9.99999974E-6 : f32
    %64 = vector.broadcast %cst_32 : f32 to vector<8x1xf32>
    %65 = arith.addf %63, %64 : vector<8x1xf32>
    %66 = math.rsqrt %65 : vector<8x1xf32>
    %67 = vector.broadcast %54 : vector<8x1xf32> to vector<8x32xf32>
    %68 = arith.subf %50, %67 : vector<8x32xf32>
    %c0_33 = arith.constant 0 : index
    %c0_34 = arith.constant 0 : index
    %69 = vector.load %arg10[%c0_33, %c0_34] : memref<1x32xf32, #tpu.memory_space<vmem>>, vector<1x32xf32>
    %70 = vector.broadcast %66 : vector<8x1xf32> to vector<8x32xf32>
    %71 = vector.broadcast %69 : vector<1x32xf32> to vector<8x32xf32>
    %72 = arith.mulf %70, %71 : vector<8x32xf32>
    %73 = arith.mulf %68, %72 : vector<8x32xf32>
    %c0_35 = arith.constant 0 : index
    %c0_36 = arith.constant 0 : index
    %74 = vector.load %arg11[%c0_35, %c0_36] : memref<1x32xf32, #tpu.memory_space<vmem>>, vector<1x32xf32>
    %75 = vector.broadcast %74 : vector<1x32xf32> to vector<8x32xf32>
    %76 = arith.addf %73, %75 : vector<8x32xf32>
    %cst_37 = arith.constant 0.000000e+00 : f32
    %77 = vector.broadcast %cst_37 : f32 to vector<8x32xf32>
    %78 = arith.maximumf %76, %77 : vector<8x32xf32>
    %79 = arith.truncf %78 : vector<8x32xf32> to vector<8x32xbf16>
    %c0_38 = arith.constant 0 : index
    %c0_39 = arith.constant 0 : index
    %80 = vector.load %arg12[%c0_38, %c0_39] : memref<32x128xbf16, #tpu.memory_space<vmem>>, vector<32x128xbf16>
    %cst_40 = arith.constant dense<0.000000e+00> : vector<8x128xf32>
    %81 = tpu.matmul %79, %80, %cst_40 {dimension_numbers = #tpu.dot_dimension_numbers<[1], [0], [0], [1], [0, 0, 1, 1], [], []>} : vector<8x32xbf16>, vector<32x128xbf16>, vector<8x128xf32> -> vector<8x128xf32>
    %c0_41 = arith.constant 0 : index
    %c0_42 = arith.constant 0 : index
    %82 = vector.load %arg13[%c0_41, %c0_42] : memref<1x128xf32, #tpu.memory_space<vmem>>, vector<1x128xf32>
    %83 = vector.broadcast %82 : vector<1x128xf32> to vector<8x128xf32>
    %84 = arith.addf %81, %83 : vector<8x128xf32>
    %c0_43 = arith.constant 0 : index
    %c0_44 = arith.constant 0 : index
    %85 = vector.load %arg14[%c0_43, %c0_44] : memref<1x128xf32, #tpu.memory_space<vmem>>, vector<1x128xf32>
    %c0_45 = arith.constant 0 : index
    %c0_46 = arith.constant 0 : index
    %86 = vector.load %arg15[%c0_45, %c0_46] : memref<1x128xf32, #tpu.memory_space<vmem>>, vector<1x128xf32>
    %87 = vector.broadcast %85 : vector<1x128xf32> to vector<8x128xf32>
    %88 = arith.maximumf %87, %84 : vector<8x128xf32>
    %89 = vector.broadcast %86 : vector<1x128xf32> to vector<8x128xf32>
    %90 = arith.minimumf %89, %88 : vector<8x128xf32>
    %c0_47 = arith.constant 0 : index
    %c0_48 = arith.constant 0 : index
    %91 = vector.load %arg16[%c0_47, %c0_48] : memref<1x128xf32, #tpu.memory_space<vmem>>, vector<1x128xf32>
    %cst_49 = arith.constant 5.000000e-01 : f32
    %92 = vector.broadcast %cst_49 : f32 to vector<1x128xf32>
    %93 = arith.cmpf ogt, %91, %92 : vector<1x128xf32>
    %94 = math.exp %90 : vector<8x128xf32>
    %95 = vector.shape_cast %93 : vector<1x128xi1> to vector<1x128xi1>
    %96 = vector.broadcast %95 : vector<1x128xi1> to vector<8x128xi1>
    %97 = arith.select %96, %94, %90 : vector<8x128xi1>, vector<8x128xf32>
    %c0_50 = arith.constant 0 : index
    %c0_51 = arith.constant 0 : index
    %98 = vector.load %arg17[%c0_50, %c0_51] : memref<8x128xf32, #tpu.memory_space<vmem>>, vector<8x128xf32>
    tpu.vector_store %arg17[%c0_50, %c0_51], %97 {strides = array<i32>} : memref<8x128xf32, #tpu.memory_space<vmem>>, vector<8x128xf32>,
    return
  }
  func.func @transform_0(%arg0: i32) -> (i32, i32) {
    %c0_i32 = arith.constant 0 : i32
    %c0_i32_0 = arith.constant 0 : i32
    return %arg0, %c0_i32 : i32, i32
  }
  func.func @transform_1(%arg0: i32) -> (i32, i32) {
    %c0_i32 = arith.constant 0 : i32
    %c0_i32_0 = arith.constant 0 : i32
    %c0_i32_1 = arith.constant 0 : i32
    return %c0_i32, %c0_i32_0 : i32, i32
  }
  func.func @transform_2(%arg0: i32) -> (i32, i32) {
    %c0_i32 = arith.constant 0 : i32
    %c0_i32_0 = arith.constant 0 : i32
    %c0_i32_1 = arith.constant 0 : i32
    return %c0_i32, %c0_i32_0 : i32, i32
  }
  func.func @transform_3(%arg0: i32) -> (i32, i32) {
    %c0_i32 = arith.constant 0 : i32
    %c0_i32_0 = arith.constant 0 : i32
    %c0_i32_1 = arith.constant 0 : i32
    return %c0_i32, %c0_i32_0 : i32, i32
  }
  func.func @transform_4(%arg0: i32) -> (i32, i32) {
    %c0_i32 = arith.constant 0 : i32
    %c0_i32_0 = arith.constant 0 : i32
    %c0_i32_1 = arith.constant 0 : i32
    return %c0_i32, %c0_i32_0 : i32, i32
  }
  func.func @transform_5(%arg0: i32) -> (i32, i32) {
    %c0_i32 = arith.constant 0 : i32
    %c0_i32_0 = arith.constant 0 : i32
    %c0_i32_1 = arith.constant 0 : i32
    return %c0_i32, %c0_i32_0 : i32, i32
  }
  func.func @transform_6(%arg0: i32) -> (i32, i32) {
    %c0_i32 = arith.constant 0 : i32
    %c0_i32_0 = arith.constant 0 : i32
    %c0_i32_1 = arith.constant 0 : i32
    return %c0_i32, %c0_i32_0 : i32, i32
  }
  func.func @transform_7(%arg0: i32) -> (i32, i32) {
    %c0_i32 = arith.constant 0 : i32
    %c0_i32_0 = arith.constant 0 : i32
    %c0_i32_1 = arith.constant 0 : i32
    return %c0_i32, %c0_i32_0 : i32, i32
  }
  func.func @transform_8(%arg0: i32) -> (i32, i32) {
    %c0_i32 = arith.constant 0 : i32
    %c0_i32_0 = arith.constant 0 : i32
    %c0_i32_1 = arith.constant 0 : i32
    return %c0_i32, %c0_i32_0 : i32, i32
  }
  func.func @transform_9(%arg0: i32) -> (i32, i32) {
    %c0_i32 = arith.constant 0 : i32
    %c0_i32_0 = arith.constant 0 : i32
    %c0_i32_1 = arith.constant 0 : i32
    return %c0_i32, %c0_i32_0 : i32, i32
  }
  func.func @transform_10(%arg0: i32) -> (i32, i32) {
    %c0_i32 = arith.constant 0 : i32
    %c0_i32_0 = arith.constant 0 : i32
    %c0_i32_1 = arith.constant 0 : i32
    return %c0_i32, %c0_i32_0 : i32, i32
  }
  func.func @transform_11(%arg0: i32) -> (i32, i32) {
    %c0_i32 = arith.constant 0 : i32
    %c0_i32_0 = arith.constant 0 : i32
    %c0_i32_1 = arith.constant 0 : i32
    return %c0_i32, %c0_i32_0 : i32, i32
  }
  func.func @transform_12(%arg0: i32) -> (i32, i32) {
    %c0_i32 = arith.constant 0 : i32
    %c0_i32_0 = arith.constant 0 : i32
    %c0_i32_1 = arith.constant 0 : i32
    return %c0_i32, %c0_i32_0 : i32, i32
  }
  func.func @transform_13(%arg0: i32) -> (i32, i32) {
    %c0_i32 = arith.constant 0 : i32
    %c0_i32_0 = arith.constant 0 : i32
    %c0_i32_1 = arith.constant 0 : i32
    return %c0_i32, %c0_i32_0 : i32, i32
  }
  func.func @transform_14(%arg0: i32) -> (i32, i32) {
    %c0_i32 = arith.constant 0 : i32
    %c0_i32_0 = arith.constant 0 : i32
    %c0_i32_1 = arith.constant 0 : i32
    return %c0_i32, %c0_i32_0 : i32, i32
  }
  func.func @transform_15(%arg0: i32) -> (i32, i32) {
    %c0_i32 = arith.constant 0 : i32
    %c0_i32_0 = arith.constant 0 : i32
    %c0_i32_1 = arith.constant 0 : i32
    return %c0_i32, %c0_i32_0 : i32, i32
  }
  func.func @transform_16(%arg0: i32) -> (i32, i32) {
    %c0_i32 = arith.constant 0 : i32
    %c0_i32_0 = arith.constant 0 : i32
    return %arg0, %c0_i32 : i32, i32
  }
}

</mosaic_0001>

<llo_original>
// kernel: tpu_custom_call.1
$region0: #{tpu_custom_call.1}
  #allocation0 [shape = 'u32[]', space=smem, size = 0x4, offset = 0x4, fixed_abs, tag = 'smem constant byte address 0x4 - core index']
  #allocation1 [shape = 'u32[144,128]{1,0:T(1,128)}', space=vmem, size = 0x12000, scoped, tag = 'internal scratch']
  %s0 = inlined_call_operand.hbm [shape: f32[8,16], index: 0, kind: input, shape index: {}]
  %s1 = inlined_call_operand.vmem [shape: f32[1,16], index: 1, kind: input, shape index: {}]
  %s2 = inlined_call_operand.vmem [shape: f32[1,16], index: 2, kind: input, shape index: {}]
  %s3 = inlined_call_operand.hbm [shape: bf16[16,32], index: 3, kind: input, shape index: {}]
  %s4 = inlined_call_operand.hbm [shape: f32[1,32], index: 4, kind: input, shape index: {}]
  %s5 = inlined_call_operand.hbm [shape: f32[1,32], index: 5, kind: input, shape index: {}]
  %s6 = inlined_call_operand.hbm [shape: f32[1,32], index: 6, kind: input, shape index: {}]
  %s7 = inlined_call_operand.vmem [shape: bf16[32,32], index: 7, kind: input, shape index: {}]
  %s8 = inlined_call_operand.hbm [shape: f32[1,32], index: 8, kind: input, shape index: {}]
  %s9 = inlined_call_operand.hbm [shape: f32[1,32], index: 9, kind: input, shape index: {}]
  %s10 = inlined_call_operand.vmem [shape: f32[1,32], index: 10, kind: input, shape index: {}]
  %s11 = inlined_call_operand.vmem [shape: bf16[32,128], index: 11, kind: input, shape index: {}]
  %s12 = inlined_call_operand.vmem [shape: f32[1,128], index: 12, kind: input, shape index: {}]
  %s13 = inlined_call_operand.vmem [shape: f32[1,128], index: 13, kind: input, shape index: {}]
  %s14 = inlined_call_operand.vmem [shape: f32[1,128], index: 14, kind: input, shape index: {}]
  %s15 = inlined_call_operand.vmem [shape: f32[1,128], index: 15, kind: input, shape index: {}]
  %s16 = inlined_call_operand.hbm [shape: f32[8,128], index: 16, kind: output, shape index: {}]
  %s17 = sld [smem:[#allocation0]]
  $region102: #{tpu_custom_call.1} parent=0
    _
  %s19 = ssub.s32 1, %s17
  %s20 = scalar_select 0, %s19, %s17
  $region1: #{tpu_custom_call.1} parent=0
    #allocation2 [shape = 'u8[4096]{0}', space=vmem, size = 0x1000, scoped, tag = 'input window, operand 0, single buffered']
    #allocation3 [shape = 's32[1]{0}', space=sflag, size = 0x4, scoped, tag = 'scoped memory for tpu_custom_call.1']
    #allocation4 [shape = 's32[1]{0}', space=sflag, size = 0x4, scoped, tag = 'scoped memory for tpu_custom_call.1']
    #allocation5 [shape = 'u8[4096]{0}', space=vmem, size = 0x1000, scoped, tag = 'input window, operand 3, single buffered']
    #allocation6 [shape = 's32[1]{0}', space=sflag, size = 0x4, scoped, tag = 'scoped memory for tpu_custom_call.1']
    #allocation7 [shape = 'u8[512]{0}', space=vmem, size = 0x400, scoped, tag = 'input window, operand 4, single buffered']
    #allocation8 [shape = 'u8[512]{0}', space=vmem, size = 0x400, scoped, tag = 'input window, operand 5, single buffered']
    #allocation9 [shape = 's32[1]{0}', space=sflag, size = 0x4, scoped, tag = 'scoped memory for tpu_custom_call.1']
    #allocation10 [shape = 'u8[512]{0}', space=vmem, size = 0x400, scoped, tag = 'input window, operand 6, single buffered']
    #allocation11 [shape = 'u8[512]{0}', space=vmem, size = 0x400, scoped, tag = 'input window, operand 8, single buffered']
    #allocation12 [shape = 's32[1]{0}', space=sflag, size = 0x4, scoped, tag = 'scoped memory for tpu_custom_call.1']
    #allocation13 [shape = 'u8[512]{0}', space=vmem, size = 0x400, scoped, tag = 'input window, operand 9, single buffered']
    #allocation14 [shape = 'u8[4096]{0}', space=vmem, size = 0x1000, scoped, tag = 'output window, operand 0, single buffered']
    %21 = vsyncpa [#allocation3], 0
    %22 = vsyncpa [#allocation6], 0
    %23 = vsyncpa [#allocation9], 0
    %24 = vsyncpa [#allocation12], 0
    %25 = vsyncpa [#allocation4], 0
    // Predicated region
    $region2: #{tpu_custom_call.1} parent=1 // pred_check
      _
    $region3: #{tpu_custom_call.1} parent=1 // pred_check_branch
      %27 = sbr.rel (0) target = $region5
    $region4: #{tpu_custom_call.1} parent=1 // pred_region
      %s29 = ssub.s32 128, 128
      %30 = vsyncadd [#allocation3], %s29
      %s32 = sshll.u32 [#allocation2], 4
      %s33 = int_to_ptr.vmem [resolvable:$true] %s32
      %35 = dma.hbm_to_vmem [thread:$0]  %s0, 128, %s33, [#allocation3]
    $region5: #{tpu_custom_call.1} parent=1 // pred_fallthru
      _
    // Predicated region
    $region6: #{tpu_custom_call.1} parent=1 // pred_check
      _
    $region7: #{tpu_custom_call.1} parent=1 // pred_check_branch
      %37 = sbr.rel (0) target = $region9
    $region8: #{tpu_custom_call.1} parent=1 // pred_region
      _
    $region9: #{tpu_custom_call.1} parent=1 // pred_fallthru
      _
    // Predicated region
    $region10: #{tpu_custom_call.1} parent=1 // pred_check
      _
    $region11: #{tpu_custom_call.1} parent=1 // pred_check_branch
      %39 = sbr.rel (0) target = $region13
    $region12: #{tpu_custom_call.1} parent=1 // pred_region
      _
    $region13: #{tpu_custom_call.1} parent=1 // pred_fallthru
      _
    // Predicated region
    $region14: #{tpu_custom_call.1} parent=1 // pred_check
      _
    $region15: #{tpu_custom_call.1} parent=1 // pred_check_branch
      %41 = sbr.rel (0) target = $region17
    $region16: #{tpu_custom_call.1} parent=1 // pred_region
      %s43 = ssub.s32 128, 128
      %44 = vsyncadd [#allocation6], %s43
      %s45 = sshll.u32 [#allocation5], 4
      %s46 = int_to_ptr.vmem [resolvable:$true] %s45
      %51 = dma.hbm_to_vmem [thread:$0]  %s3, 128, %s46, [#allocation6], 64, 64, 4
    $region17: #{tpu_custom_call.1} parent=1 // pred_fallthru
      _
    // Predicated region
    $region18: #{tpu_custom_call.1} parent=1 // pred_check
      _
    $region19: #{tpu_custom_call.1} parent=1 // pred_check_branch
      %53 = sbr.rel (0) target = $region21
    $region20: #{tpu_custom_call.1} parent=1 // pred_region
      %s55 = ssub.s32 16, 16
      %56 = vsyncadd [#allocation6], %s55
      %s58 = sshll.u32 [#allocation7], 4
      %s59 = int_to_ptr.vmem [resolvable:$true] %s58
      %61 = dma.hbm_to_vmem [thread:$0]  %s4, 16, %s59, [#allocation6]
    $region21: #{tpu_custom_call.1} parent=1 // pred_fallthru
      _
    // Predicated region
    $region22: #{tpu_custom_call.1} parent=1 // pred_check
      _
    $region23: #{tpu_custom_call.1} parent=1 // pred_check_branch
      %63 = sbr.rel (0) target = $region25
    $region24: #{tpu_custom_call.1} parent=1 // pred_region
      %s65 = ssub.s32 16, 16
      %66 = vsyncadd [#allocation9], %s65
      %s68 = sshll.u32 [#allocation8], 4
      %s69 = int_to_ptr.vmem [resolvable:$true] %s68
      %71 = dma.hbm_to_vmem [thread:$0]  %s5, 16, %s69, [#allocation9]
    $region25: #{tpu_custom_call.1} parent=1 // pred_fallthru
      _
    // Predicated region
    $region26: #{tpu_custom_call.1} parent=1 // pred_check
      _
    $region27: #{tpu_custom_call.1} parent=1 // pred_check_branch
      %73 = sbr.rel (0) target = $region29
    $region28: #{tpu_custom_call.1} parent=1 // pred_region
      %s75 = ssub.s32 16, 16
      %76 = vsyncadd [#allocation9], %s75
      %s78 = sshll.u32 [#allocation10], 4
      %s79 = int_to_ptr.vmem [resolvable:$true] %s78
      %81 = dma.hbm_to_vmem [thread:$0]  %s6, 16, %s79, [#allocation9]
    $region29: #{tpu_custom_call.1} parent=1 // pred_fallthru
      _
    // Predicated region
    $region30: #{tpu_custom_call.1} parent=1 // pred_check
      _
    $region31: #{tpu_custom_call.1} parent=1 // pred_check_branch
      %83 = sbr.rel (0) target = $region33
    $region32: #{tpu_custom_call.1} parent=1 // pred_region
      _
    $region33: #{tpu_custom_call.1} parent=1 // pred_fallthru
      _
    // Predicated region
    $region34: #{tpu_custom_call.1} parent=1 // pred_check
      _
    $region35: #{tpu_custom_call.1} parent=1 // pred_check_branch
      %85 = sbr.rel (0) target = $region37
    $region36: #{tpu_custom_call.1} parent=1 // pred_region
      %s87 = ssub.s32 16, 16
      %88 = vsyncadd [#allocation12], %s87
      %s90 = sshll.u32 [#allocation11], 4
      %s91 = int_to_ptr.vmem [resolvable:$true] %s90
      %93 = dma.hbm_to_vmem [thread:$0]  %s8, 16, %s91, [#allocation12]
    $region37: #{tpu_custom_call.1} parent=1 // pred_fallthru
      _
    // Predicated region
    $region38: #{tpu_custom_call.1} parent=1 // pred_check
      _
    $region39: #{tpu_custom_call.1} parent=1 // pred_check_branch
      %95 = sbr.rel (0) target = $region41
    $region40: #{tpu_custom_call.1} parent=1 // pred_region
      %s97 = ssub.s32 16, 16
      %98 = vsyncadd [#allocation12], %s97
      %s100 = sshll.u32 [#allocation13], 4
      %s101 = int_to_ptr.vmem [resolvable:$true] %s100
      %103 = dma.hbm_to_vmem [thread:$0]  %s9, 16, %s101, [#allocation12]
    $region41: #{tpu_custom_call.1} parent=1 // pred_fallthru
      _
    // Predicated region
    $region42: #{tpu_custom_call.1} parent=1 // pred_check
      _
    $region43: #{tpu_custom_call.1} parent=1 // pred_check_branch
      %105 = sbr.rel (0) target = $region45
    $region44: #{tpu_custom_call.1} parent=1 // pred_region
      _
    $region45: #{tpu_custom_call.1} parent=1 // pred_fallthru
      _
    // Predicated region
    $region46: #{tpu_custom_call.1} parent=1 // pred_check
      _
    $region47: #{tpu_custom_call.1} parent=1 // pred_check_branch
      %107 = sbr.rel (0) target = $region49
    $region48: #{tpu_custom_call.1} parent=1 // pred_region
      _
    $region49: #{tpu_custom_call.1} parent=1 // pred_fallthru
      _
    // Predicated region
    $region50: #{tpu_custom_call.1} parent=1 // pred_check
      _
    $region51: #{tpu_custom_call.1} parent=1 // pred_check_branch
      %109 = sbr.rel (0) target = $region53
    $region52: #{tpu_custom_call.1} parent=1 // pred_region
      _
    $region53: #{tpu_custom_call.1} parent=1 // pred_fallthru
      _
    // Predicated region
    $region54: #{tpu_custom_call.1} parent=1 // pred_check
      _
    $region55: #{tpu_custom_call.1} parent=1 // pred_check_branch
      %111 = sbr.rel (0) target = $region57
    $region56: #{tpu_custom_call.1} parent=1 // pred_region
      _
    $region57: #{tpu_custom_call.1} parent=1 // pred_fallthru
      _
    // Predicated region
    $region58: #{tpu_custom_call.1} parent=1 // pred_check
      _
    $region59: #{tpu_custom_call.1} parent=1 // pred_check_branch
      %113 = sbr.rel (0) target = $region61
    $region60: #{tpu_custom_call.1} parent=1 // pred_region
      _
    $region61: #{tpu_custom_call.1} parent=1 // pred_fallthru
      _
    // Predicated region
    $region62: #{tpu_custom_call.1} parent=1 // pred_check
      _
    $region63: #{tpu_custom_call.1} parent=1 // pred_check_branch
      %115 = sbr.rel (0) target = $region65
    $region64: #{tpu_custom_call.1} parent=1 // pred_region
      _
    $region65: #{tpu_custom_call.1} parent=1 // pred_fallthru
      _
    // Predicated region
    $region66: #{tpu_custom_call.1} parent=1 // pred_check
      _
    $region67: #{tpu_custom_call.1} parent=1 // pred_check_branch
      %117 = sbr.rel (0) target = $region69
    $region68: #{tpu_custom_call.1} parent=1 // pred_region
      %118 = dma.done [#allocation3], 128
    $region69: #{tpu_custom_call.1} parent=1 // pred_fallthru
      _
    // Predicated region
    $region70: #{tpu_custom_call.1} parent=1 // pred_check
      _
    $region71: #{tpu_custom_call.1} parent=1 // pred_check_branch
      %120 = sbr.rel (0) target = $region73
    $region72: #{tpu_custom_call.1} parent=1 // pred_region
      %121 = dma.done [#allocation6], 128
    $region73: #{tpu_custom_call.1} parent=1 // pred_fallthru
      _
    // Predicated region
    $region74: #{tpu_custom_call.1} parent=1 // pred_check
      _
    $region75: #{tpu_custom_call.1} parent=1 // pred_check_branch
      %123 = sbr.rel (0) target = $region77
    $region76: #{tpu_custom_call.1} parent=1 // pred_region
      %124 = dma.done [#allocation6], 16
    $region77: #{tpu_custom_call.1} parent=1 // pred_fallthru
      _
    // Predicated region
    $region78: #{tpu_custom_call.1} parent=1 // pred_check
      _
    $region79: #{tpu_custom_call.1} parent=1 // pred_check_branch
      %126 = sbr.rel (0) target = $region81
    $region80: #{tpu_custom_call.1} parent=1 // pred_region
      %127 = dma.done [#allocation9], 16
    $region81: #{tpu_custom_call.1} parent=1 // pred_fallthru
      _
    // Predicated region
    $region82: #{tpu_custom_call.1} parent=1 // pred_check
      _
    $region83: #{tpu_custom_call.1} parent=1 // pred_check_branch
      %129 = sbr.rel (0) target = $region85
    $region84: #{tpu_custom_call.1} parent=1 // pred_region
      %130 = dma.done [#allocation9], 16
    $region85: #{tpu_custom_call.1} parent=1 // pred_fallthru
      _
    // Predicated region
    $region86: #{tpu_custom_call.1} parent=1 // pred_check
      _
    $region87: #{tpu_custom_call.1} parent=1 // pred_check_branch
      %132 = sbr.rel (0) target = $region89
    $region88: #{tpu_custom_call.1} parent=1 // pred_region
      %133 = dma.done [#allocation12], 16
    $region89: #{tpu_custom_call.1} parent=1 // pred_fallthru
      _
    // Predicated region
    $region90: #{tpu_custom_call.1} parent=1 // pred_check
      _
    $region91: #{tpu_custom_call.1} parent=1 // pred_check_branch
      %135 = sbr.rel (0) target = $region93
    $region92: #{tpu_custom_call.1} parent=1 // pred_region
      %136 = dma.done [#allocation12], 16
    $region93: #{tpu_custom_call.1} parent=1 // pred_fallthru
      _
    %v138 = vld [vmem:[#allocation2] sm:$0xff]
    %v139 = vld [vmem:[%s1] sm:$0x1]
    %v141 = vlaneseq
    %v142 = vshrl.u32 %v141, 7
    %v143 = vsub.s32 0, %v142
    %v144 = vrot.slane %v139, %v143
    %v146 = vmul.f32 %v138, %v144
    %v147 = vld [vmem:[%s2] sm:$0x1]
    %v149 = vlaneseq
    %v150 = vshrl.u32 %v149, 7
    %v151 = vsub.s32 0, %v150
    %v152 = vrot.slane %v147, %v151
    %v154 = vsub.f32 %v146, %v152
    %v155 = vmax.f32 %v154, -5.0
    %v156 = vmin.f32 %v155, 5.0
    %v157 = vpack.c.bf16 %v156, %v156
    %v158 = vld [vmem:[#allocation5] sm:$0xf]
    %v159 = vld [vmem:[#allocation5 + $0x4] sm:$0xf]
    %v160 = vld [vmem:[#allocation7] sm:$0x1]
    %v162 = vlaneseq
    %v163 = vshrl.u32 %v162, 7
    %v164 = vsub.s32 0, %v163
    %v165 = vrot.slane %v160, %v164
    %v169 = vunpack.c.l.b16 %v158
    %v170 = vunpack.c.l.b16 %v159
    %v171 = vpack.c.b16 %v170, %v169
    %vm173 = vcmask 130048
    %v175 = vsel %vm173, %v157, 0
    %177 = vmatprep.subr.bf16.mxu0 0
    %178 = vmatpush1.bf16.msra.mxu0 %v171
    %179 = vmatprep.subr.bf16.mxu0 0
    %180 = vmatpush1.bf16.msra.mxu0 0
    %181 = vmatprep.subr.bf16.mxu0 0
    %182 = vmatpush1.bf16.msra.mxu0 0
    %183 = vmatprep.subr.bf16.mxu0 0
    %184 = vmatpush1.bf16.msra.mxu0 0
    %185 = vmatprep.subr.bf16.mxu0 0
    %186 = vmatpush1.bf16.msra.mxu0 0
    %187 = vmatprep.subr.bf16.mxu0 0
    %188 = vmatpush1.bf16.msra.mxu0 0
    %189 = vmatprep.subr.bf16.mxu0 0
    %190 = vmatpush1.bf16.msra.mxu0 0
    %191 = vmatprep.subr.bf16.mxu0 0
    %192 = vmatpush1.bf16.msra.mxu0 0
    %193 = vmatprep.subr.bf16.mxu0 0
    %194 = vmatpush1.bf16.msra.mxu0 0
    %195 = vmatprep.subr.bf16.mxu0 0
    %196 = vmatpush1.bf16.msra.mxu0 0
    %197 = vmatprep.subr.bf16.mxu0 0
    %198 = vmatpush1.bf16.msra.mxu0 0
    %199 = vmatprep.subr.bf16.mxu0 0
    %200 = vmatpush1.bf16.msra.mxu0 0
    %201 = vmatprep.subr.bf16.mxu0 0
    %202 = vmatpush1.bf16.msra.mxu0 0
    %203 = vmatprep.subr.bf16.mxu0 0
    %204 = vmatpush1.bf16.msra.mxu0 0
    %205 = vmatprep.subr.bf16.mxu0 0
    %206 = vmatpush1.bf16.msra.mxu0 0
    %207 = vmatprep.subr.bf16.mxu0 0
    %208 = vmatpush1.bf16.msra.mxu0 0
    %209 = vmatprep.mubr.bf16.mxu0 0
    %210 = vmatmul.mubr.bf16.gmra.mrb[0].mxu0 %v175
    %v211 = vpop.f32.mrb[0].mxu0
    %v212 = vadd.f32 %v165, %v211
    %v213 = vpop.f32.mrb[0].mxu0
    %v214 = vpop.f32.mrb[0].mxu0
    %v215 = vpop.f32.mrb[0].mxu0
    %216 = vdwg.mxu0
    %vm217 = vcmask 261120
    %v218 = vsel %vm217, %v212, 0.0
    %219 = vadd.xlane.f32.xlu0 %v218
    %v220 = vpop.xlane.xlu0 %219
    %v221 = vrcp.pop 32.0
    %v222 = vmul.f32 %v220, %v221
    %v223 = vmul.f32 %v212, %v212
    %v224 = vsel %vm217, %v223, 0.0
    %225 = vadd.xlane.f32.xlu0 %v224
    %v226 = vpop.xlane.xlu0 %225
    %v227 = vmul.f32 %v226, %v221
    %v228 = vmul.f32 %v222, %v222
    %v229 = vsub.f32 %v227, %v228
    %v230 = vmax.f32 %v229, 0.0
    %v231 = vadd.f32 %v230, 1e-05
    %v232 = vrsqrt.pop %v231
    %v233 = vsub.f32 %v212, %v222
    %v234 = vld [vmem:[#allocation8] sm:$0x1]
    %v236 = vlaneseq
    %v237 = vshrl.u32 %v236, 7
    %v238 = vsub.s32 0, %v237
    %v239 = vrot.slane %v234, %v238
    %v241 = vmul.f32 %v232, %v239
    %v242 = vmul.f32 %v233, %v241
    %v243 = vld [vmem:[#allocation10] sm:$0x1]
    %v245 = vlaneseq
    %v246 = vshrl.u32 %v245, 7
    %v247 = vsub.s32 0, %v246
    %v248 = vrot.slane %v243, %v247
    %v250 = vadd.f32 %v242, %v248
    %v251 = vmax.f32 %v250, 0.0
    %v252 = vpack.c.bf16 %v251, %v251
    %v253 = vld [vmem:[%s7] sm:$0xf]
    %v254 = vld [vmem:[%s7 + $0x4] sm:$0xf]
    %v255 = vld [vmem:[%s7 + $0x8] sm:$0xf]
    %v256 = vld [vmem:[%s7 + $0xc] sm:$0xf]
    %v257 = vld [vmem:[#allocation11] sm:$0x1]
    %v259 = vlaneseq
    %v260 = vshrl.u32 %v259, 7
    %v261 = vsub.s32 0, %v260
    %v262 = vrot.slane %v257, %v261
    %v268 = vunpack.c.l.b16 %v253
    %v269 = vunpack.c.l.b16 %v254
    %v270 = vunpack.c.l.b16 %v255
    %v271 = vunpack.c.l.b16 %v256
    %v272 = vpack.c.b16 %v269, %v268
    %v273 = vpack.c.b16 %v271, %v270
    %v277 = vsel %vm217, %v252, 0
    %279 = vmatprep.subr.bf16.mxu0 0
    %280 = vmatpush1.bf16.msra.mxu0 %v272
    %281 = vmatprep.subr.bf16.mxu0 0
    %282 = vmatpush1.bf16.msra.mxu0 %v273
    %283 = vmatprep.subr.bf16.mxu0 0
    %284 = vmatpush1.bf16.msra.mxu0 0
    %285 = vmatprep.subr.bf16.mxu0 0
    %286 = vmatpush1.bf16.msra.mxu0 0
    %287 = vmatprep.subr.bf16.mxu0 0
    %288 = vmatpush1.bf16.msra.mxu0 0
    %289 = vmatprep.subr.bf16.mxu0 0
    %290 = vmatpush1.bf16.msra.mxu0 0
    %291 = vmatprep.subr.bf16.mxu0 0
    %292 = vmatpush1.bf16.msra.mxu0 0
    %293 = vmatprep.subr.bf16.mxu0 0
    %294 = vmatpush1.bf16.msra.mxu0 0
    %295 = vmatprep.subr.bf16.mxu0 0
    %296 = vmatpush1.bf16.msra.mxu0 0
    %297 = vmatprep.subr.bf16.mxu0 0
    %298 = vmatpush1.bf16.msra.mxu0 0
    %299 = vmatprep.subr.bf16.mxu0 0
    %300 = vmatpush1.bf16.msra.mxu0 0
    %301 = vmatprep.subr.bf16.mxu0 0
    %302 = vmatpush1.bf16.msra.mxu0 0
    %303 = vmatprep.subr.bf16.mxu0 0
    %304 = vmatpush1.bf16.msra.mxu0 0
    %305 = vmatprep.subr.bf16.mxu0 0
    %306 = vmatpush1.bf16.msra.mxu0 0
    %307 = vmatprep.subr.bf16.mxu0 0
    %308 = vmatpush1.bf16.msra.mxu0 0
    %309 = vmatprep.subr.bf16.mxu0 0
    %310 = vmatpush1.bf16.msra.mxu0 0
    %311 = vmatprep.mubr.bf16.mxu0 0
    %312 = vmatmul.mubr.bf16.gmra.mrb[0].mxu0 %v277
    %v313 = vpop.f32.mrb[0].mxu0
    %v314 = vadd.f32 %v262, %v313
    %v315 = vpop.f32.mrb[0].mxu0
    %v316 = vpop.f32.mrb[0].mxu0
    %v317 = vpop.f32.mrb[0].mxu0
    %318 = vdwg.mxu0
    %v319 = vsel %vm217, %v314, 0.0
    %320 = vadd.xlane.f32.xlu0 %v319
    %v321 = vpop.xlane.xlu0 %320
    %v322 = vmul.f32 %v321, %v221
    %v323 = vmul.f32 %v314, %v314
    %v324 = vsel %vm217, %v323, 0.0
    %325 = vadd.xlane.f32.xlu0 %v324
    %v326 = vpop.xlane.xlu0 %325
    %v327 = vmul.f32 %v326, %v221
    %v328 = vmul.f32 %v322, %v322
    %v329 = vsub.f32 %v327, %v328
    %v330 = vmax.f32 %v329, 0.0
    %v331 = vadd.f32 %v330, 1e-05
    %v332 = vrsqrt.pop %v331
    %v333 = vsub.f32 %v314, %v322
    %v334 = vld [vmem:[#allocation13] sm:$0x1]
    %v336 = vlaneseq
    %v337 = vshrl.u32 %v336, 7
    %v338 = vsub.s32 0, %v337
    %v339 = vrot.slane %v334, %v338
    %v341 = vmul.f32 %v332, %v339
    %v342 = vmul.f32 %v333, %v341
    %v343 = vld [vmem:[%s10] sm:$0x1]
    %v345 = vlaneseq
    %v346 = vshrl.u32 %v345, 7
    %v347 = vsub.s32 0, %v346
    %v348 = vrot.slane %v343, %v347
    %v350 = vadd.f32 %v342, %v348
    %v351 = vmax.f32 %v350, 0.0
    %v352 = vpack.c.bf16 %v351, %v351
    %v353 = vld [vmem:[%s11] sm:$0xf]
    %v354 = vld [vmem:[%s11 + $0x4] sm:$0xf]
    %v355 = vld [vmem:[%s11 + $0x8] sm:$0xf]
    %v356 = vld [vmem:[%s11 + $0xc] sm:$0xf]
    %v357 = vld [vmem:[%s12] sm:$0x1]
    %v359 = vlaneseq
    %v360 = vshrl.u32 %v359, 7
    %v361 = vsub.s32 0, %v360
    %v362 = vrot.slane %v357, %v361
    %v368 = vunpack.c.l.b16 %v353
    %v369 = vunpack.c.l.b16 %v354
    %v370 = vunpack.c.l.b16 %v355
    %v371 = vunpack.c.l.b16 %v356
    %v372 = vpack.c.b16 %v369, %v368
    %v373 = vpack.c.b16 %v371, %v370
    %v377 = vsel %vm217, %v352, 0
    %379 = vmatprep.subr.bf16.mxu0 0
    %380 = vmatpush1.bf16.msra.mxu0 %v372
    %381 = vmatprep.subr.bf16.mxu0 0
    %382 = vmatpush1.bf16.msra.mxu0 %v373
    %383 = vmatprep.subr.bf16.mxu0 0
    %384 = vmatpush1.bf16.msra.mxu0 0
    %385 = vmatprep.subr.bf16.mxu0 0
    %386 = vmatpush1.bf16.msra.mxu0 0
    %387 = vmatprep.subr.bf16.mxu0 0
    %388 = vmatpush1.bf16.msra.mxu0 0
    %389 = vmatprep.subr.bf16.mxu0 0
    %390 = vmatpush1.bf16.msra.mxu0 0
    %391 = vmatprep.subr.bf16.mxu0 0
    %392 = vmatpush1.bf16.msra.mxu0 0
    %393 = vmatprep.subr.bf16.mxu0 0
    %394 = vmatpush1.bf16.msra.mxu0 0
    %395 = vmatprep.subr.bf16.mxu0 0
    %396 = vmatpush1.bf16.msra.mxu0 0
    %397 = vmatprep.subr.bf16.mxu0 0
    %398 = vmatpush1.bf16.msra.mxu0 0
    %399 = vmatprep.subr.bf16.mxu0 0
    %400 = vmatpush1.bf16.msra.mxu0 0
    %401 = vmatprep.subr.bf16.mxu0 0
    %402 = vmatpush1.bf16.msra.mxu0 0
    %403 = vmatprep.subr.bf16.mxu0 0
    %404 = vmatpush1.bf16.msra.mxu0 0
    %405 = vmatprep.subr.bf16.mxu0 0
    %406 = vmatpush1.bf16.msra.mxu0 0
    %407 = vmatprep.subr.bf16.mxu0 0
    %408 = vmatpush1.bf16.msra.mxu0 0
    %409 = vmatprep.subr.bf16.mxu0 0
    %410 = vmatpush1.bf16.msra.mxu0 0
    %411 = vmatprep.mubr.bf16.mxu0 0
    %412 = vmatmul.mubr.bf16.gmra.mrb[0].mxu0 %v377
    %v413 = vpop.f32.mrb[0].mxu0
    %v414 = vadd.f32 %v362, %v413
    %v415 = vpop.f32.mrb[0].mxu0
    %v416 = vpop.f32.mrb[0].mxu0
    %v417 = vpop.f32.mrb[0].mxu0
    %418 = vdwg.mxu0
    %v419 = vld [vmem:[%s13] sm:$0x1]
    %v420 = vld [vmem:[%s14] sm:$0x1]
    %v422 = vlaneseq
    %v423 = vshrl.u32 %v422, 7
    %v424 = vsub.s32 0, %v423
    %v425 = vrot.slane %v419, %v424
    %v427 = vmax.f32 %v425, %v414
    %v429 = vlaneseq
    %v430 = vshrl.u32 %v429, 7
    %v431 = vsub.s32 0, %v430
    %v432 = vrot.slane %v420, %v431
    %v434 = vmin.f32 %v432, %v427
    %v435 = vld [vmem:[%s15] sm:$0x1]
    %vm436 = vcmp.gt.f32.partialorder %v435, 0.5
    %v437 = vmul.f32 %v434, 1.442695
    %v438 = vpow.pop %v437
    %v439 = vsel %vm436, 1, 0
    %v440 = vlaneseq
    %v441 = vshrl.u32 %v440, 7
    %v442 = vsub.s32 0, %v441
    %v443 = vrot.slane %v439, %v442
    %vm444 = vcmp.eq.s32.totalorder %v443, 1
    %v445 = vsel %vm444, %v438, %v434
    %446 = vst [vmem:[#allocation14] sm:$0xff] %v445
    // Predicated region
    $region94: #{tpu_custom_call.1} parent=1 // pred_check
      _
    $region95: #{tpu_custom_call.1} parent=1 // pred_check_branch
      %448 = sbr.rel (0) target = $region97
    $region96: #{tpu_custom_call.1} parent=1 // pred_region
      %s450 = ssub.s32 128, 128
      %451 = vsyncadd [#allocation4], %s450
      %s453 = sshll.u32 [#allocation14], 4
      %s454 = int_to_ptr.vmem [resolvable:$true] %s453
      %456 = dma.vmem_to_hbm [thread:$0]  %s454, 128, %s16, [#allocation4]
    $region97: #{tpu_custom_call.1} parent=1 // pred_fallthru
      _
    // Predicated region
    $region98: #{tpu_custom_call.1} parent=1 // pred_check
      _
    $region99: #{tpu_custom_call.1} parent=1 // pred_check_branch
      %458 = sbr.rel (0) target = $region101
    $region100: #{tpu_custom_call.1} parent=1 // pred_region
      %459 = dma.done [#allocation4], 128
    $region101: #{tpu_custom_call.1} parent=1 // pred_fallthru
      _
    %460 = vsyncpa [#allocation3], 1
    %461 = vsyncpa [#allocation6], 1
    %462 = vsyncpa [#allocation9], 1
    %463 = vsyncpa [#allocation12], 1
    %464 = vsyncpa [#allocation4], 1

</llo_original>
